<compile_context>
chip_gen: v7x
topology: tpu7x:2x2x1
jax: 0.10.0
libtpu: 0.0.40
codegen_flags: <defaults>
</compile_context>

<pallas_src>
import functools

import jax
import jax.numpy as jnp
from jax.experimental import pallas as pl
from jax.experimental.pallas import tpu as pltpu


def _softplus(z):
    # Single-branch numerically-stable softplus; matches
    # torch.nn.functional.softplus to f32 precision (for z > 20 the
    # correction term underflows to 0, same as torch's threshold path).
    return jnp.maximum(z, 0.0) + jnp.log1p(jnp.exp(-jnp.abs(z)))


def actor_beta_kernel(x_ref, w1_ref, b1_ref, wh_ref, bh_ref, out_ref):
    x = x_ref[...]                                               # [tm, S]
    # Hidden layer: tanh(x @ W1 + b1)   (MXU matmul, f32 accumulate)
    h = jnp.tanh(
        jnp.dot(x, w1_ref[...], preferred_element_type=jnp.float32)
        + b1_ref[...]
    )                                                            # [tm, Hp]
    # Fused (and lane-padded) alpha|beta heads: one matmul, one lane-dense
    # [tm, A2p] store.
    z = jnp.dot(h, wh_ref[...], preferred_element_type=jnp.float32) + bh_ref[...]
    out_ref[...] = _softplus(z) + 1.0                            # [tm, A2p]


def _round_up(x, m):
    return ((x + m - 1) // m) * m


@functools.partial(jax.jit, static_argnames=("action_dim", "block_m"))
def actor_beta_forward(state, fused_params, action_dim, *, block_m=256):
    """state: [B, state_dim] f32.

    fused_params (already lane-padded, see prepare_params):
        w1      [S, Hp]    b1      [1, Hp]
        w_heads [Hp, A2p]  b_heads [1, A2p]
        (alpha head lives in cols [:action_dim], beta in
         [action_dim:2*action_dim]; the rest is zero padding.)
    Returns (alpha [B, action_dim], beta [B, action_dim]).
    """
    B, S = state.shape
    Hp = fused_params["w1"].shape[1]
    A2p = fused_params["w_heads"].shape[1]
    A = action_dim

    # Tile the batch; pad to a multiple of the tile (sublane multiple of 8).
    tm = min(block_m, _round_up(B, 8))
    b_pad = _round_up(B, tm)
    if b_pad != B:
        state = jnp.pad(state, ((0, b_pad - B), (0, 0)))
    grid = (b_pad // tm,)

    const = lambda shape: pl.BlockSpec(shape, lambda i: (0, 0))

    cost = pl.CostEstimate(
        flops=2 * b_pad * (S * Hp + Hp * A2p),
        transcendentals=b_pad * (Hp + 2 * A2p),          # tanh + exp/log1p
        bytes_accessed=4 * (b_pad * S + S * Hp + Hp + Hp * A2p + A2p
                            + b_pad * A2p),
    )

    out = pl.pallas_call(
        actor_beta_kernel,
        out_shape=jax.ShapeDtypeStruct((b_pad, A2p), jnp.float32),
        grid=grid,
        in_specs=[
            pl.BlockSpec((tm, S), lambda i: (i, 0)),   # state tile
            const((S, Hp)),                            # W1   (VMEM-resident)
            const((1, Hp)),                            # b1
            const((Hp, A2p)),                          # Wa|Wb (padded)
            const((1, A2p)),                           # ba|bb (padded)
        ],
        out_specs=pl.BlockSpec((tm, A2p), lambda i: (i, 0)),
        compiler_params=pltpu.CompilerParams(
            dimension_semantics=("parallel",),
        ),
        cost_estimate=cost,
    )(state, fused_params["w1"], fused_params["b1"],
      fused_params["w_heads"], fused_params["b_heads"])

    out = out[:B]
    return out[:, :A], out[:, A:2 * A]


def init_params(key, state_dim, action_dim, nn_width):
    """Deterministic synthetic parameter init (shapes match the nn.Linear
    layers), stored pre-transposed as [in, out]."""
    k1, k2, k3, k4, k5, k6 = jax.random.split(key, 6)
    s1 = 1.0 / jnp.sqrt(state_dim)
    s2 = 1.0 / jnp.sqrt(nn_width)
    return {
        "w1": jax.random.uniform(k1, (state_dim, nn_width), jnp.float32, -s1, s1),
        "b1": jax.random.uniform(k2, (1, nn_width), jnp.float32, -s1, s1),
        "wa": jax.random.uniform(k3, (nn_width, action_dim), jnp.float32, -s2, s2),
        "ba": jax.random.uniform(k4, (1, action_dim), jnp.float32, -s2, s2),
        "wb": jax.random.uniform(k5, (nn_width, action_dim), jnp.float32, -s2, s2),
        "bb": jax.random.uniform(k6, (1, action_dim), jnp.float32, -s2, s2),
    }


def prepare_params(params):
    """One-time JAX glue (outside the hot path):
      * fuse the alpha/beta heads into a single matmul,
      * zero-pad the hidden width and the fused head width up to multiples of
        128 lanes so in-kernel activations/stores are lane-dense.
    Padding is inert: padded hidden cols are tanh(0)=0 and the matching head
    rows are 0, so real output columns are bit-identical to the unpadded math.
    """
    H = params["w1"].shape[1]
    A2 = params["wa"].shape[1] + params["wb"].shape[1]
    Hp = _round_up(H, 128)
    A2p = _round_up(A2, 128)

    w1 = jnp.pad(params["w1"], ((0, 0), (0, Hp - H)))
    b1 = jnp.pad(params["b1"], ((0, 0), (0, Hp - H)))
    w_heads = jnp.concatenate([params["wa"], params["wb"]], axis=1)   # [H, 2A]
    w_heads = jnp.pad(w_heads, ((0, Hp - H), (0, A2p - A2)))          # [Hp, A2p]
    b_heads = jnp.concatenate([params["ba"], params["bb"]], axis=1)   # [1, 2A]
    b_heads = jnp.pad(b_heads, ((0, 0), (0, A2p - A2)))               # [1, A2p]
    return {"w1": w1, "b1": b1, "w_heads": w_heads, "b_heads": b_heads}


def _reference_forward(state, p):
    h = jnp.tanh(state @ p["w1"] + p["b1"])
    alpha = jax.nn.softplus(h @ p["wa"] + p["ba"]) + 1.0
    beta = jax.nn.softplus(h @ p["wb"] + p["bb"]) + 1.0
    return alpha, beta


if __name__ == "__main__":
    # Small shapes consistent with the module (state-vector MLP actor).
    batch, state_dim, action_dim, nn_width = 8, 16, 4, 32

    key = jax.random.PRNGKey(0)
    kp, kx, kx2 = jax.random.split(key, 3)
    params = init_params(kp, state_dim, action_dim, nn_width)
    fused = prepare_params(params)

    # --- small batch (single grid point) ---
    state = jax.random.normal(kx, (batch, state_dim), jnp.float32)
    alpha, beta = actor_beta_forward(state, fused, action_dim)
    jax.block_until_ready((alpha, beta))

    ra, rb = _reference_forward(state, params)
    assert alpha.shape == (batch, action_dim) and beta.shape == (batch, action_dim)
    assert jnp.allclose(alpha, ra, atol=1e-5, rtol=1e-5)
    assert jnp.allclose(beta, rb, atol=1e-5, rtol=1e-5)
    # Beta-distribution parameters must be > 1 by construction (softplus + 1).
    assert bool(jnp.all(alpha > 1.0)) and bool(jnp.all(beta > 1.0))

    # --- wider, non-multiple batch (exercises padding + parallel grid path) ---
    big_b = 300
    state_big = jax.random.normal(kx2, (big_b, state_dim), jnp.float32)
    a_big, b_big = actor_beta_forward(state_big, fused, action_dim, block_m=128)
    jax.block_until_ready((a_big, b_big))
    ra_big, rb_big = _reference_forward(state_big, params)
    assert a_big.shape == (big_b, action_dim)
    assert jnp.allclose(a_big, ra_big, atol=1e-5, rtol=1e-5)
    assert jnp.allclose(b_big, rb_big, atol=1e-5, rtol=1e-5)

    print("KERNEL_OK")
</pallas_src>

<mosaic_0001>
module attributes {stable_mosaic.version = 11 : i64} {
  func.func @actor_beta_kernel(%arg0: i32, %arg1: memref<8x16xf32, #tpu.memory_space<vmem>>, %arg2: memref<16x128xf32, #tpu.memory_space<vmem>>, %arg3: memref<1x128xf32, #tpu.memory_space<vmem>>, %arg4: memref<128x128xf32, #tpu.memory_space<vmem>>, %arg5: memref<1x128xf32, #tpu.memory_space<vmem>>, %arg6: memref<8x128xf32, #tpu.memory_space<vmem>>) attributes {dimension_semantics = [#tpu.dimension_semantics<parallel>], iteration_bounds = array<i64: 1>, scalar_prefetch = 0 : i64, scratch_operands = 0 : i64, tpu.core_type = #tpu.core_type<tc>, window_params = [{transform_indices = @transform_0, window_bounds = array<i64: 8, 16>}, {pipeline_mode = #tpu.pipeline_mode<synchronous>, transform_indices = @transform_1, window_bounds = array<i64: 16, 128>}, {pipeline_mode = #tpu.pipeline_mode<synchronous>, transform_indices = @transform_2, window_bounds = array<i64: 1, 128>}, {pipeline_mode = #tpu.pipeline_mode<synchronous>, transform_indices = @transform_3, window_bounds = array<i64: 128, 128>}, {pipeline_mode = #tpu.pipeline_mode<synchronous>, transform_indices = @transform_4, window_bounds = array<i64: 1, 128>}, {transform_indices = @transform_5, window_bounds = array<i64: 8, 128>}]} {
    %c0 = arith.constant 0 : index
    %c0_0 = arith.constant 0 : index
    %0 = vector.load %arg1[%c0, %c0_0] : memref<8x16xf32, #tpu.memory_space<vmem>>, vector<8x16xf32>
    %c0_1 = arith.constant 0 : index
    %c0_2 = arith.constant 0 : index
    %1 = vector.load %arg2[%c0_1, %c0_2] : memref<16x128xf32, #tpu.memory_space<vmem>>, vector<16x128xf32>
    %cst = arith.constant dense<0.000000e+00> : vector<8x128xf32>
    %2 = tpu.matmul %0, %1, %cst {dimension_numbers = #tpu.dot_dimension_numbers<[1], [0], [0], [1], [0, 0, 1, 1], [], []>} : vector<8x16xf32>, vector<16x128xf32>, vector<8x128xf32> -> vector<8x128xf32>
    %c0_3 = arith.constant 0 : index
    %c0_4 = arith.constant 0 : index
    %3 = vector.load %arg3[%c0_3, %c0_4] : memref<1x128xf32, #tpu.memory_space<vmem>>, vector<1x128xf32>
    %4 = vector.broadcast %3 : vector<1x128xf32> to vector<8x128xf32>
    %5 = arith.addf %2, %4 : vector<8x128xf32>
    %6 = math.tanh %5 : vector<8x128xf32>
    %c0_5 = arith.constant 0 : index
    %c0_6 = arith.constant 0 : index
    %7 = vector.load %arg4[%c0_5, %c0_6] : memref<128x128xf32, #tpu.memory_space<vmem>>, vector<128x128xf32>
    %cst_7 = arith.constant dense<0.000000e+00> : vector<8x128xf32>
    %8 = tpu.matmul %6, %7, %cst_7 {dimension_numbers = #tpu.dot_dimension_numbers<[1], [0], [0], [1], [0, 0, 1, 1], [], []>} : vector<8x128xf32>, vector<128x128xf32>, vector<8x128xf32> -> vector<8x128xf32>
    %c0_8 = arith.constant 0 : index
    %c0_9 = arith.constant 0 : index
    %9 = vector.load %arg5[%c0_8, %c0_9] : memref<1x128xf32, #tpu.memory_space<vmem>>, vector<1x128xf32>
    %10 = vector.broadcast %9 : vector<1x128xf32> to vector<8x128xf32>
    %11 = arith.addf %8, %10 : vector<8x128xf32>
    %cst_10 = arith.constant 0.000000e+00 : f32
    %12 = vector.broadcast %cst_10 : f32 to vector<8x128xf32>
    %13 = arith.maximumf %11, %12 : vector<8x128xf32>
    %14 = math.absf %11 : vector<8x128xf32>
    %cst_11 = arith.constant 0.000000e+00 : f32
    %15 = vector.broadcast %cst_11 : f32 to vector<8x128xf32>
    %16 = arith.subf %15, %14 : vector<8x128xf32>
    %17 = math.exp %16 : vector<8x128xf32>
    %18 = math.log1p %17 : vector<8x128xf32>
    %19 = arith.addf %13, %18 : vector<8x128xf32>
    %cst_12 = arith.constant 1.000000e+00 : f32
    %20 = vector.broadcast %cst_12 : f32 to vector<8x128xf32>
    %21 = arith.addf %19, %20 : vector<8x128xf32>
    %c0_13 = arith.constant 0 : index
    %c0_14 = arith.constant 0 : index
    %22 = vector.load %arg6[%c0_13, %c0_14] : memref<8x128xf32, #tpu.memory_space<vmem>>, vector<8x128xf32>
    tpu.vector_store %arg6[%c0_13, %c0_14], %21 {strides = array<i32>} : memref<8x128xf32, #tpu.memory_space<vmem>>, vector<8x128xf32>,
    return
  }
  func.func @transform_0(%arg0: i32) -> (i32, i32) {
    %c0_i32 = arith.constant 0 : i32
    %c0_i32_0 = arith.constant 0 : i32
    return %arg0, %c0_i32 : i32, i32
  }
  func.func @transform_1(%arg0: i32) -> (i32, i32) {
    %c0_i32 = arith.constant 0 : i32
    %c0_i32_0 = arith.constant 0 : i32
    %c0_i32_1 = arith.constant 0 : i32
    return %c0_i32, %c0_i32_0 : i32, i32
  }
  func.func @transform_2(%arg0: i32) -> (i32, i32) {
    %c0_i32 = arith.constant 0 : i32
    %c0_i32_0 = arith.constant 0 : i32
    %c0_i32_1 = arith.constant 0 : i32
    return %c0_i32, %c0_i32_0 : i32, i32
  }
  func.func @transform_3(%arg0: i32) -> (i32, i32) {
    %c0_i32 = arith.constant 0 : i32
    %c0_i32_0 = arith.constant 0 : i32
    %c0_i32_1 = arith.constant 0 : i32
    return %c0_i32, %c0_i32_0 : i32, i32
  }
  func.func @transform_4(%arg0: i32) -> (i32, i32) {
    %c0_i32 = arith.constant 0 : i32
    %c0_i32_0 = arith.constant 0 : i32
    %c0_i32_1 = arith.constant 0 : i32
    return %c0_i32, %c0_i32_0 : i32, i32
  }
  func.func @transform_5(%arg0: i32) -> (i32, i32) {
    %c0_i32 = arith.constant 0 : i32
    %c0_i32_0 = arith.constant 0 : i32
    return %arg0, %c0_i32 : i32, i32
  }
}

</mosaic_0001>

<llo_original>
// kernel: actor_beta_forward.1
$region0: #{actor_beta_forward.1}
  #allocation0 [shape = 'u32[]', space=smem, size = 0x4, offset = 0x4, fixed_abs, tag = 'smem constant byte address 0x4 - core index']
  #allocation1 [shape = 'u32[144,128]{1,0:T(1,128)}', space=vmem, size = 0x12000, scoped, tag = 'internal scratch']
  %s0 = inlined_call_operand.hbm [shape: f32[8,16], index: 0, kind: input, shape index: {}]
  %s1 = inlined_call_operand.hbm [shape: f32[16,128], index: 1, kind: input, shape index: {}]
  %s2 = inlined_call_operand.vmem [shape: f32[1,128], index: 2, kind: input, shape index: {}]
  %s3 = inlined_call_operand.hbm [shape: f32[128,128], index: 3, kind: input, shape index: {}]
  %s4 = inlined_call_operand.vmem [shape: f32[1,128], index: 4, kind: input, shape index: {}]
  %s5 = inlined_call_operand.vmem [shape: f32[8,128], index: 5, kind: output, shape index: {}]
  %s6 = sld [smem:[#allocation0]]
  $region42: #{actor_beta_forward.1} parent=0
    _
  %s8 = ssub.s32 1, %s6
  %s9 = scalar_select 0, %s8, %s6
  $region1: #{actor_beta_forward.1} parent=0
    #allocation2 [shape = 'u8[4096]{0}', space=vmem, size = 0x1000, scoped, tag = 'input window, operand 0, single buffered']
    #allocation3 [shape = 's32[1]{0}', space=sflag, size = 0x4, scoped, tag = 'scoped memory for actor_beta_forward.1']
    #allocation4 [shape = 'u8[8192]{0}', space=vmem, size = 0x2000, scoped, tag = 'input window, operand 1, single buffered']
    #allocation5 [shape = 's32[1]{0}', space=sflag, size = 0x4, scoped, tag = 'scoped memory for actor_beta_forward.1']
    #allocation6 [shape = 'u8[65536]{0}', space=vmem, size = 0x10000, scoped, tag = 'input window, operand 3, single buffered']
    %10 = vsyncpa [#allocation3], 0
    %11 = vsyncpa [#allocation5], 0
    // Predicated region
    $region2: #{actor_beta_forward.1} parent=1 // pred_check
      _
    $region3: #{actor_beta_forward.1} parent=1 // pred_check_branch
      %13 = sbr.rel (0) target = $region5
    $region4: #{actor_beta_forward.1} parent=1 // pred_region
      %s15 = ssub.s32 128, 128
      %16 = vsyncadd [#allocation3], %s15
      %s18 = sshll.u32 [#allocation2], 4
      %s19 = int_to_ptr.vmem [resolvable:$true] %s18
      %21 = dma.hbm_to_vmem [thread:$0]  %s0, 128, %s19, [#allocation3]
    $region5: #{actor_beta_forward.1} parent=1 // pred_fallthru
      _
    // Predicated region
    $region6: #{actor_beta_forward.1} parent=1 // pred_check
      _
    $region7: #{actor_beta_forward.1} parent=1 // pred_check_branch
      %23 = sbr.rel (0) target = $region9
    $region8: #{actor_beta_forward.1} parent=1 // pred_region
      %s25 = ssub.s32 256, 256
      %26 = vsyncadd [#allocation5], %s25
      %s27 = sshll.u32 [#allocation4], 4
      %s28 = int_to_ptr.vmem [resolvable:$true] %s27
      %33 = dma.hbm_to_vmem [thread:$0]  %s1, 256, %s28, [#allocation5], 128, 128, 8
    $region9: #{actor_beta_forward.1} parent=1 // pred_fallthru
      _
    // Predicated region
    $region10: #{actor_beta_forward.1} parent=1 // pred_check
      _
    $region11: #{actor_beta_forward.1} parent=1 // pred_check_branch
      %35 = sbr.rel (0) target = $region13
    $region12: #{actor_beta_forward.1} parent=1 // pred_region
      _
    $region13: #{actor_beta_forward.1} parent=1 // pred_fallthru
      _
    // Predicated region
    $region14: #{actor_beta_forward.1} parent=1 // pred_check
      _
    $region15: #{actor_beta_forward.1} parent=1 // pred_check_branch
      %37 = sbr.rel (0) target = $region17
    $region16: #{actor_beta_forward.1} parent=1 // pred_region
      %s39 = ssub.s32 2048, 2048
      %40 = vsyncadd [#allocation5], %s39
      %s41 = sshll.u32 [#allocation6], 4
      %s42 = int_to_ptr.vmem [resolvable:$true] %s41
      %47 = dma.hbm_to_vmem [thread:$0]  %s3, 2048, %s42, [#allocation5], 128, 128, 8
    $region17: #{actor_beta_forward.1} parent=1 // pred_fallthru
      _
    // Predicated region
    $region18: #{actor_beta_forward.1} parent=1 // pred_check
      _
    $region19: #{actor_beta_forward.1} parent=1 // pred_check_branch
      %49 = sbr.rel (0) target = $region21
    $region20: #{actor_beta_forward.1} parent=1 // pred_region
      _
    $region21: #{actor_beta_forward.1} parent=1 // pred_fallthru
      _
    // Predicated region
    $region22: #{actor_beta_forward.1} parent=1 // pred_check
      _
    $region23: #{actor_beta_forward.1} parent=1 // pred_check_branch
      %51 = sbr.rel (0) target = $region25
    $region24: #{actor_beta_forward.1} parent=1 // pred_region
      %52 = dma.done [#allocation3], 128
    $region25: #{actor_beta_forward.1} parent=1 // pred_fallthru
      _
    // Predicated region
    $region26: #{actor_beta_forward.1} parent=1 // pred_check
      _
    $region27: #{actor_beta_forward.1} parent=1 // pred_check_branch
      %54 = sbr.rel (0) target = $region29
    $region28: #{actor_beta_forward.1} parent=1 // pred_region
      %55 = dma.done [#allocation5], 256
    $region29: #{actor_beta_forward.1} parent=1 // pred_fallthru
      _
    // Predicated region
    $region30: #{actor_beta_forward.1} parent=1 // pred_check
      _
    $region31: #{actor_beta_forward.1} parent=1 // pred_check_branch
      %57 = sbr.rel (0) target = $region33
    $region32: #{actor_beta_forward.1} parent=1 // pred_region
      %58 = dma.done [#allocation5], 2048
    $region33: #{actor_beta_forward.1} parent=1 // pred_fallthru
      _
    %v59 = vld [vmem:[#allocation2] sm:$0xff]
    %v60 = vld [vmem:[#allocation4] sm:$0xff]
    %v61 = vld [vmem:[#allocation4 + $0x8] sm:$0xff]
    %v62 = vld [vmem:[%s2] sm:$0x1]
    %v64 = vlaneseq
    %v65 = vshrl.u32 %v64, 7
    %v66 = vsub.s32 0, %v65
    %v67 = vrot.slane %v62, %v66
    %vm69 = vcmask 130048
    %v71 = vsel %vm69, %v59, 0
    %73 = vmatprep.subr.mxu0 0.0
    %74 = vmatpush1.msra.mxu0 %v60
    %75 = vmatprep.subr.mxu0 0.0
    %76 = vmatpush1.msra.mxu0 %v61
    %77 = vmatprep.subr.mxu0 0.0
    %78 = vmatpush1.msra.mxu0 0.0
    %79 = vmatprep.subr.mxu0 0.0
    %80 = vmatpush1.msra.mxu0 0.0
    %81 = vmatprep.subr.mxu0 0.0
    %82 = vmatpush1.msra.mxu0 0.0
    %83 = vmatprep.subr.mxu0 0.0
    %84 = vmatpush1.msra.mxu0 0.0
    %85 = vmatprep.subr.mxu0 0.0
    %86 = vmatpush1.msra.mxu0 0.0
    %87 = vmatprep.subr.mxu0 0.0
    %88 = vmatpush1.msra.mxu0 0.0
    %89 = vmatprep.subr.mxu0 0.0
    %90 = vmatpush1.msra.mxu0 0.0
    %91 = vmatprep.subr.mxu0 0.0
    %92 = vmatpush1.msra.mxu0 0.0
    %93 = vmatprep.subr.mxu0 0.0
    %94 = vmatpush1.msra.mxu0 0.0
    %95 = vmatprep.subr.mxu0 0.0
    %96 = vmatpush1.msra.mxu0 0.0
    %97 = vmatprep.subr.mxu0 0.0
    %98 = vmatpush1.msra.mxu0 0.0
    %99 = vmatprep.subr.mxu0 0.0
    %100 = vmatpush1.msra.mxu0 0.0
    %101 = vmatprep.subr.mxu0 0.0
    %102 = vmatpush1.msra.mxu0 0.0
    %103 = vmatprep.subr.mxu0 0.0
    %104 = vmatpush1.msra.mxu0 0.0
    %105 = vmatprep.subr.mxu0 0.0
    %106 = vmatpush1.msra.mxu0 0.0
    %107 = vmatprep.subr.mxu0 0.0
    %108 = vmatpush1.msra.mxu0 0.0
    %109 = vmatprep.subr.mxu0 0.0
    %110 = vmatpush1.msra.mxu0 0.0
    %111 = vmatprep.subr.mxu0 0.0
    %112 = vmatpush1.msra.mxu0 0.0
    %113 = vmatprep.subr.mxu0 0.0
    %114 = vmatpush1.msra.mxu0 0.0
    %115 = vmatprep.subr.mxu0 0.0
    %116 = vmatpush1.msra.mxu0 0.0
    %117 = vmatprep.subr.mxu0 0.0
    %118 = vmatpush1.msra.mxu0 0.0
    %119 = vmatprep.subr.mxu0 0.0
    %120 = vmatpush1.msra.mxu0 0.0
    %121 = vmatprep.subr.mxu0 0.0
    %122 = vmatpush1.msra.mxu0 0.0
    %123 = vmatprep.subr.mxu0 0.0
    %124 = vmatpush1.msra.mxu0 0.0
    %125 = vmatprep.subr.mxu0 0.0
    %126 = vmatpush1.msra.mxu0 0.0
    %127 = vmatprep.subr.mxu0 0.0
    %128 = vmatpush1.msra.mxu0 0.0
    %129 = vmatprep.subr.mxu0 0.0
    %130 = vmatpush1.msra.mxu0 0.0
    %131 = vmatprep.subr.mxu0 0.0
    %132 = vmatpush1.msra.mxu0 0.0
    %133 = vmatprep.subr.mxu0 0.0
    %134 = vmatpush1.msra.mxu0 0.0
    %135 = vmatprep.subr.mxu0 0.0
    %136 = vmatpush1.msra.mxu0 0.0
    %137 = vmatprep.mubr.f32.mxu0 0.0
    %138 = vmatmul.mubr.f32.gmra.mrb[0].mxu0 %v71
    %v139 = vpop.f32.mrb[0].mxu0
    %v140 = vadd.f32 %v67, %v139
    %v141 = vpop.f32.mrb[0].mxu0
    %142 = vdwg.mxu0
    %v143 = vtanh.pop %v140
    %v144 = vld [vmem:[#allocation6] sm:$0xff]
    %v145 = vld [vmem:[#allocation6 + $0x8] sm:$0xff]
    %v146 = vld [vmem:[#allocation6 + $0x10] sm:$0xff]
    %v147 = vld [vmem:[#allocation6 + $0x18] sm:$0xff]
    %v148 = vld [vmem:[#allocation6 + $0x20] sm:$0xff]
    %v149 = vld [vmem:[#allocation6 + $0x28] sm:$0xff]
    %v150 = vld [vmem:[#allocation6 + $0x30] sm:$0xff]
    %v151 = vld [vmem:[#allocation6 + $0x38] sm:$0xff]
    %v152 = vld [vmem:[#allocation6 + $0x40] sm:$0xff]
    %v153 = vld [vmem:[#allocation6 + $0x48] sm:$0xff]
    %v154 = vld [vmem:[#allocation6 + $0x50] sm:$0xff]
    %v155 = vld [vmem:[#allocation6 + $0x58] sm:$0xff]
    %v156 = vld [vmem:[#allocation6 + $0x60] sm:$0xff]
    %v157 = vld [vmem:[#allocation6 + $0x68] sm:$0xff]
    %v158 = vld [vmem:[#allocation6 + $0x70] sm:$0xff]
    %v159 = vld [vmem:[#allocation6 + $0x78] sm:$0xff]
    %v160 = vld [vmem:[%s4] sm:$0x1]
    %v162 = vlaneseq
    %v163 = vshrl.u32 %v162, 7
    %v164 = vsub.s32 0, %v163
    %v165 = vrot.slane %v160, %v164
    %167 = vmatprep.subr.mxu0 0.0
    %168 = vmatpush1.msra.mxu0 %v144
    %169 = vmatprep.subr.mxu0 0.0
    %170 = vmatpush1.msra.mxu0 %v145
    %171 = vmatprep.subr.mxu0 0.0
    %172 = vmatpush1.msra.mxu0 %v146
    %173 = vmatprep.subr.mxu0 0.0
    %174 = vmatpush1.msra.mxu0 %v147
    %175 = vmatprep.subr.mxu0 0.0
    %176 = vmatpush1.msra.mxu0 %v148
    %177 = vmatprep.subr.mxu0 0.0
    %178 = vmatpush1.msra.mxu0 %v149
    %179 = vmatprep.subr.mxu0 0.0
    %180 = vmatpush1.msra.mxu0 %v150
    %181 = vmatprep.subr.mxu0 0.0
    %182 = vmatpush1.msra.mxu0 %v151
    %183 = vmatprep.subr.mxu0 0.0
    %184 = vmatpush1.msra.mxu0 %v152
    %185 = vmatprep.subr.mxu0 0.0
    %186 = vmatpush1.msra.mxu0 %v153
    %187 = vmatprep.subr.mxu0 0.0
    %188 = vmatpush1.msra.mxu0 %v154
    %189 = vmatprep.subr.mxu0 0.0
    %190 = vmatpush1.msra.mxu0 %v155
    %191 = vmatprep.subr.mxu0 0.0
    %192 = vmatpush1.msra.mxu0 %v156
    %193 = vmatprep.subr.mxu0 0.0
    %194 = vmatpush1.msra.mxu0 %v157
    %195 = vmatprep.subr.mxu0 0.0
    %196 = vmatpush1.msra.mxu0 %v158
    %197 = vmatprep.subr.mxu0 0.0
    %198 = vmatpush1.msra.mxu0 %v159
    %199 = vmatprep.subr.mxu0 0.0
    %200 = vmatpush1.msra.mxu0 0.0
    %201 = vmatprep.subr.mxu0 0.0
    %202 = vmatpush1.msra.mxu0 0.0
    %203 = vmatprep.subr.mxu0 0.0
    %204 = vmatpush1.msra.mxu0 0.0
    %205 = vmatprep.subr.mxu0 0.0
    %206 = vmatpush1.msra.mxu0 0.0
    %207 = vmatprep.subr.mxu0 0.0
    %208 = vmatpush1.msra.mxu0 0.0
    %209 = vmatprep.subr.mxu0 0.0
    %210 = vmatpush1.msra.mxu0 0.0
    %211 = vmatprep.subr.mxu0 0.0
    %212 = vmatpush1.msra.mxu0 0.0
    %213 = vmatprep.subr.mxu0 0.0
    %214 = vmatpush1.msra.mxu0 0.0
    %215 = vmatprep.subr.mxu0 0.0
    %216 = vmatpush1.msra.mxu0 0.0
    %217 = vmatprep.subr.mxu0 0.0
    %218 = vmatpush1.msra.mxu0 0.0
    %219 = vmatprep.subr.mxu0 0.0
    %220 = vmatpush1.msra.mxu0 0.0
    %221 = vmatprep.subr.mxu0 0.0
    %222 = vmatpush1.msra.mxu0 0.0
    %223 = vmatprep.subr.mxu0 0.0
    %224 = vmatpush1.msra.mxu0 0.0
    %225 = vmatprep.subr.mxu0 0.0
    %226 = vmatpush1.msra.mxu0 0.0
    %227 = vmatprep.subr.mxu0 0.0
    %228 = vmatpush1.msra.mxu0 0.0
    %229 = vmatprep.subr.mxu0 0.0
    %230 = vmatpush1.msra.mxu0 0.0
    %231 = vmatprep.mubr.f32.mxu0 0.0
    %232 = vmatmul.mubr.f32.gmra.mrb[0].mxu0 %v143
    %v233 = vpop.f32.mrb[0].mxu0
    %v234 = vadd.f32 %v165, %v233
    %v235 = vpop.f32.mrb[0].mxu0
    %236 = vdwg.mxu0
    %v237 = vmax.f32 %v234, 0.0
    %v238 = vand.u32 2147483647, %v234
    %v239 = vsub.f32 0.0, %v238
    %v240 = vmul.f32 %v239, 1.442695
    %v241 = vpow.pop %v240
    %v242 = vadd.f32 %v241, 1.0
    %v243 = vlog2.pop %v242
    %v244 = vmul.f32 %v243, 0.6931472
    %v245 = vmul.f32 -0.5, %v241
    %v246 = vadd.f32 %v245, 1.0
    %v247 = vmul.f32 %v246, %v241
    %v248 = vand.u32 2147483647, %v241
    %vm249 = vcmp.lt.f32.partialorder %v248, 0.0004427343
    %v250 = vsel %vm249, %v247, %v244
    %v251 = vadd.f32 %v237, %v250
    %v252 = vadd.f32 %v251, 1.0
    %253 = vst [vmem:[%s5] sm:$0xff] %v252
    // Predicated region
    $region34: #{actor_beta_forward.1} parent=1 // pred_check
      _
    $region35: #{actor_beta_forward.1} parent=1 // pred_check_branch
      %255 = sbr.rel (0) target = $region37
    $region36: #{actor_beta_forward.1} parent=1 // pred_region
      _
    $region37: #{actor_beta_forward.1} parent=1 // pred_fallthru
      _
    // Predicated region
    $region38: #{actor_beta_forward.1} parent=1 // pred_check
      _
    $region39: #{actor_beta_forward.1} parent=1 // pred_check_branch
      %257 = sbr.rel (0) target = $region41
    $region40: #{actor_beta_forward.1} parent=1 // pred_region
      _
    $region41: #{actor_beta_forward.1} parent=1 // pred_fallthru
      _
    %258 = vsyncpa [#allocation3], 1
    %259 = vsyncpa [#allocation5], 1

</llo_original>
